<compile_context>
chip_gen: v6e
topology: v6e:2x2x1
jax: 0.10.0
libtpu: 0.0.40
codegen_flags: <defaults>
</compile_context>

<pallas_src>
import jax
import jax.numpy as jnp
from jax.experimental import pallas as pl
from jax.experimental.pallas import tpu as pltpu

EPS = 1e-5
_MIB = 1024 * 1024


def _round_up(v, m):
    return (v + m - 1) // m * m


def _vmem_budget_bytes(frac=0.85, fallback_capacity=64 * _MIB):
    """~85% of this chip's physical VMEM (v5e/v6e: 128 MiB, v7x: 64 MiB)."""
    try:
        cap = pltpu.get_tpu_info().vmem_capacity_bytes
    except Exception:
        cap = fallback_capacity  # conservative (v7x-sized) fallback
    return int(frac * cap)


# --------------------------- kernels ---------------------------------------


def _bn_compute(x_ref, gamma_ref, beta_ref):
    """BatchNorm1d training-mode math (biased variance) in f32."""
    x = x_ref[...].astype(jnp.float32)
    mean = jnp.mean(x, axis=0, keepdims=True)
    centered = x - mean
    var = jnp.mean(centered * centered, axis=0, keepdims=True)
    inv_std = jax.lax.rsqrt(var + EPS)
    scale = inv_std * gamma_ref[...].astype(jnp.float32)
    return centered * scale + beta_ref[...].astype(jnp.float32)


def _bn_kernel(x_ref, gamma_ref, beta_ref, feat_ref):
    feat_ref[...] = _bn_compute(x_ref, gamma_ref, beta_ref).astype(feat_ref.dtype)


def _bn_kernel_dual(x_ref, gamma_ref, beta_ref, feat_ref, feat_mm_ref):
    feat = _bn_compute(x_ref, gamma_ref, beta_ref)
    feat_ref[...] = feat.astype(feat_ref.dtype)        # accurate returned features
    feat_mm_ref[...] = feat.astype(feat_mm_ref.dtype)  # MXU-dtype copy for pass 2


def _logits_kernel(feat_ref, w_ref, logit_ref):
    # feat: (N, C_in_p) resident; w: (C_in_p, TN) streamed; plain (N,K)@(K,TN).
    logit_ref[...] = jnp.dot(
        feat_ref[...], w_ref[...],
        preferred_element_type=jnp.float32).astype(logit_ref.dtype)


# --------------------------- wrappers ---------------------------------------


def prepare_classifier_weight(w, *, matmul_dtype=jnp.bfloat16):
    """ONE-TIME weight prep (do NOT call per forward):
    pad (C_out, C_in) -> 128-lane granularity, transpose to (C_in_p, C_out_p),
    cast to the matmul dtype.  Cache the result as the module parameter."""
    c_out, c_in = w.shape
    c_in_p = _round_up(c_in, 128)
    c_out_p = _round_up(c_out, 128)
    w_p = jnp.pad(w, ((0, c_out_p - c_out), (0, c_in_p - c_in)))
    return jnp.transpose(w_p).astype(matmul_dtype)   # (C_in_p, C_out_p)


def bnneck_forward(x, gamma, beta, w_t, *, c_out,
                   tile_n=2048, tile_c=2048, logits_dtype=None):
    """x: (N, C_in); gamma/beta: (C_in,);
    w_t: prepared weight (C_in_p, C_out_p) from prepare_classifier_weight."""
    n, c_in = x.shape
    c_in_p, c_out_p = w_t.shape
    assert c_in_p == _round_up(c_in, 128), "w_t not prepared for this C_in"
    assert c_out_p == _round_up(c_out, 128) and c_out_p >= c_out

    feat_dtype = x.dtype
    mm_dtype = w_t.dtype
    out_logits_dtype = feat_dtype if logits_dtype is None else logits_dtype

    fbytes = jnp.dtype(feat_dtype).itemsize
    mbytes = jnp.dtype(mm_dtype).itemsize
    lbytes = jnp.dtype(out_logits_dtype).itemsize
    need_mm_copy = jnp.dtype(mm_dtype) != jnp.dtype(feat_dtype)

    budget = _vmem_budget_bytes()

    # ---------------- pass 1: BatchNorm (grid over feature tiles) ----------
    # Zero-padding feature columns is statistics-safe: padded columns get
    # mean=0, var=0, beta=0 -> feat column exactly 0; padded W rows are 0.
    x_p = jnp.pad(x, ((0, 0), (0, c_in_p - c_in)))
    gamma_p = jnp.pad(gamma.reshape(1, c_in), ((0, 0), (0, c_in_p - c_in)),
                      constant_values=1.0)
    beta_p = jnp.pad(beta.reshape(1, c_in), ((0, 0), (0, c_in_p - c_in)))

    tc = min(_round_up(tile_c, 128), c_in_p)

    def bn_vmem(tc_):
        per_col = 2 * fbytes + 2 * fbytes + (2 * mbytes if need_mm_copy else 0)
        return n * tc_ * per_col + 32 * tc_   # + gamma/beta tiles

    while bn_vmem(tc) > budget and tc > 128:
        tc -= 128
    bn_grid = (pl.cdiv(c_in_p, tc),)
    bn_vmem_limit = int(min(budget, max(32 * _MIB, 2 * bn_vmem(tc))))
    bn_cost = pl.CostEstimate(
        flops=10 * n * c_in_p,
        transcendentals=c_in_p,
        bytes_accessed=n * c_in_p * (2 * fbytes + (mbytes if need_mm_copy else 0)))

    bn_in_specs = [
        pl.BlockSpec((n, tc), lambda j: (0, j)),   # x tile
        pl.BlockSpec((1, tc), lambda j: (0, j)),   # gamma tile
        pl.BlockSpec((1, tc), lambda j: (0, j)),   # beta tile
    ]
    bn_params = pltpu.CompilerParams(
        dimension_semantics=("parallel",),         # feature columns independent
        vmem_limit_bytes=bn_vmem_limit)

    if need_mm_copy:
        feat_p, feat_mm = pl.pallas_call(
            _bn_kernel_dual,
            out_shape=(jax.ShapeDtypeStruct((n, c_in_p), feat_dtype),
                       jax.ShapeDtypeStruct((n, c_in_p), mm_dtype)),
            grid_spec=pltpu.PrefetchScalarGridSpec(
                num_scalar_prefetch=0, grid=bn_grid,
                in_specs=bn_in_specs,
                out_specs=(pl.BlockSpec((n, tc), lambda j: (0, j)),
                           pl.BlockSpec((n, tc), lambda j: (0, j)))),
            compiler_params=bn_params,
            cost_estimate=bn_cost,
        )(x_p, gamma_p, beta_p)
    else:
        feat_p = pl.pallas_call(
            _bn_kernel,
            out_shape=jax.ShapeDtypeStruct((n, c_in_p), feat_dtype),
            grid_spec=pltpu.PrefetchScalarGridSpec(
                num_scalar_prefetch=0, grid=bn_grid,
                in_specs=bn_in_specs,
                out_specs=pl.BlockSpec((n, tc), lambda j: (0, j))),
            compiler_params=bn_params,
            cost_estimate=bn_cost,
        )(x_p, gamma_p, beta_p)
        feat_mm = feat_p

    # ---------------- pass 2: logits (grid over C_out tiles) ---------------
    tn = min(_round_up(tile_n, 128), c_out_p)

    def mm_vmem(tn_):
        return (2 * n * c_in_p * mbytes       # resident feat (double-buffered)
                + 2 * c_in_p * tn_ * mbytes   # streamed W tile (double-buffered)
                + 2 * n * tn_ * lbytes        # logits tile (double-buffered)
                + n * tn_ * 4)                # f32 matmul result

    while mm_vmem(tn) > budget and tn > 128:
        tn -= 128
    mm_grid = (pl.cdiv(c_out_p, tn),)         # partial last tile OK: no C_out
                                              # padding to a multiple of tn
    mm_vmem_limit = int(min(budget, max(32 * _MIB, int(1.5 * mm_vmem(tn)))))

    logits_p = pl.pallas_call(
        _logits_kernel,
        out_shape=jax.ShapeDtypeStruct((n, c_out_p), out_logits_dtype),
        grid_spec=pltpu.PrefetchScalarGridSpec(
            num_scalar_prefetch=0, grid=mm_grid,
            in_specs=[
                pl.BlockSpec((n, c_in_p), lambda j: (0, 0)),   # feat (resident)
                pl.BlockSpec((c_in_p, tn), lambda j: (0, j)),  # W tile (streamed)
            ],
            out_specs=pl.BlockSpec((n, tn), lambda j: (0, j))),
        compiler_params=pltpu.CompilerParams(
            # No cross-step state -> safe to shard across TensorCores (v7x).
            dimension_semantics=("parallel",),
            vmem_limit_bytes=mm_vmem_limit),
        cost_estimate=pl.CostEstimate(
            flops=2 * n * c_in_p * c_out_p,
            transcendentals=0,
            bytes_accessed=(c_in_p * c_out_p * mbytes
                            + n * c_in_p * mbytes
                            + n * c_out_p * lbytes)),
    )(feat_mm, w_t)

    return feat_p[:, :c_in], logits_p[:, :c_out]


def reference(x, gamma, beta, w):
    xf = x.astype(jnp.float32)
    mean = jnp.mean(xf, axis=0, keepdims=True)
    var = jnp.mean((xf - mean) ** 2, axis=0, keepdims=True)
    feat = (xf - mean) / jnp.sqrt(var + EPS) * gamma + beta
    logits = feat @ w.astype(jnp.float32).T
    return feat.astype(x.dtype), logits.astype(x.dtype)


if __name__ == "__main__":
    key = jax.random.PRNGKey(0)
    N, C_IN, C_OUT = 8, 32, 16

    kx, kw = jax.random.split(key)
    x = jax.random.normal(kx, (N, C_IN), dtype=jnp.float32)

    # BatchNorm1d defaults; Linear weight ~U(-1/sqrt(C_in), 1/sqrt(C_in)).
    gamma = jnp.ones((C_IN,), dtype=jnp.float32)
    beta = jnp.zeros((C_IN,), dtype=jnp.float32)
    bound = 1.0 / (C_IN ** 0.5)
    w = jax.random.uniform(kw, (C_OUT, C_IN), dtype=jnp.float32,
                           minval=-bound, maxval=bound)

    ref_feat, ref_logits = reference(x, gamma, beta, w)

    fwd = jax.jit(bnneck_forward,
                  static_argnames=("c_out", "tile_n", "tile_c", "logits_dtype"))

    # 1) Full-precision MXU path: tight check against the f32 reference.
    w_f32 = prepare_classifier_weight(w, matmul_dtype=jnp.float32)
    feat, logits = fwd(x, gamma, beta, w_f32, c_out=C_OUT)
    jax.block_until_ready((feat, logits))
    assert feat.shape == (N, C_IN) and logits.shape == (N, C_OUT)
    assert jnp.allclose(feat, ref_feat, atol=1e-4, rtol=1e-4)
    assert jnp.allclose(logits, ref_logits, atol=1e-4, rtol=1e-4)

    # 2) Default bf16 weight-stream path (one-time prep outside the hot path).
    w_bf16 = prepare_classifier_weight(w)   # bf16, padded, (C_in_p, C_out_p)
    feat_bf, logits_bf = fwd(x, gamma, beta, w_bf16, c_out=C_OUT)
    jax.block_until_ready((feat_bf, logits_bf))
    assert jnp.allclose(feat_bf, ref_feat, atol=1e-4, rtol=1e-4)
    assert jnp.allclose(logits_bf, ref_logits, atol=5e-2, rtol=5e-2)

    # 3) bf16 logits output (halves the logits HBM writeback).
    _, logits_lo = fwd(x, gamma, beta, w_bf16, c_out=C_OUT,
                       logits_dtype=jnp.bfloat16)
    jax.block_until_ready(logits_lo)
    assert jnp.allclose(logits_lo.astype(jnp.float32), ref_logits,
                        atol=5e-2, rtol=5e-2)

    print("KERNEL_OK")
</pallas_src>

<mosaic_0001>
module attributes {stable_mosaic.version = 11 : i64} {
  func.func @_bn_kernel(%arg0: i32, %arg1: memref<8x128xf32, #tpu.memory_space<vmem>>, %arg2: memref<1x128xf32, #tpu.memory_space<vmem>>, %arg3: memref<1x128xf32, #tpu.memory_space<vmem>>, %arg4: memref<8x128xf32, #tpu.memory_space<vmem>>) attributes {dimension_semantics = [#tpu.dimension_semantics<parallel>], iteration_bounds = array<i64: 1>, scalar_prefetch = 0 : i64, scratch_operands = 0 : i64, tpu.core_type = #tpu.core_type<tc>, window_params = [{transform_indices = @transform_0, window_bounds = array<i64: 8, 128>}, {transform_indices = @transform_1, window_bounds = array<i64: 1, 128>}, {transform_indices = @transform_2, window_bounds = array<i64: 1, 128>}, {transform_indices = @transform_3, window_bounds = array<i64: 8, 128>}]} {
    %c0 = arith.constant 0 : index
    %c0_0 = arith.constant 0 : index
    %0 = vector.load %arg1[%c0, %c0_0] : memref<8x128xf32, #tpu.memory_space<vmem>>, vector<8x128xf32>
    %cst = arith.constant dense<0.000000e+00> : vector<128xf32>
    %1 = vector.multi_reduction <add>, %0, %cst [0] : vector<8x128xf32> to vector<128xf32>
    %2 = vector.shape_cast %1 : vector<128xf32> to vector<1x128xf32>
    %cst_1 = arith.constant 8.000000e+00 : f32
    %3 = vector.broadcast %cst_1 : f32 to vector<1x128xf32>
    %4 = arith.divf %2, %3 : vector<1x128xf32>
    %5 = vector.broadcast %4 : vector<1x128xf32> to vector<8x128xf32>
    %6 = arith.subf %0, %5 : vector<8x128xf32>
    %7 = arith.mulf %6, %6 : vector<8x128xf32>
    %cst_2 = arith.constant dense<0.000000e+00> : vector<128xf32>
    %8 = vector.multi_reduction <add>, %7, %cst_2 [0] : vector<8x128xf32> to vector<128xf32>
    %9 = vector.shape_cast %8 : vector<128xf32> to vector<1x128xf32>
    %cst_3 = arith.constant 8.000000e+00 : f32
    %10 = vector.broadcast %cst_3 : f32 to vector<1x128xf32>
    %11 = arith.divf %9, %10 : vector<1x128xf32>
    %cst_4 = arith.constant 9.99999974E-6 : f32
    %12 = vector.broadcast %cst_4 : f32 to vector<1x128xf32>
    %13 = arith.addf %11, %12 : vector<1x128xf32>
    %14 = math.rsqrt %13 : vector<1x128xf32>
    %c0_5 = arith.constant 0 : index
    %c0_6 = arith.constant 0 : index
    %15 = vector.load %arg2[%c0_5, %c0_6] : memref<1x128xf32, #tpu.memory_space<vmem>>, vector<1x128xf32>
    %16 = arith.mulf %14, %15 : vector<1x128xf32>
    %17 = vector.broadcast %16 : vector<1x128xf32> to vector<8x128xf32>
    %18 = arith.mulf %6, %17 : vector<8x128xf32>
    %c0_7 = arith.constant 0 : index
    %c0_8 = arith.constant 0 : index
    %19 = vector.load %arg3[%c0_7, %c0_8] : memref<1x128xf32, #tpu.memory_space<vmem>>, vector<1x128xf32>
    %20 = vector.broadcast %19 : vector<1x128xf32> to vector<8x128xf32>
    %21 = arith.addf %18, %20 : vector<8x128xf32>
    %c0_9 = arith.constant 0 : index
    %c0_10 = arith.constant 0 : index
    %22 = vector.load %arg4[%c0_9, %c0_10] : memref<8x128xf32, #tpu.memory_space<vmem>>, vector<8x128xf32>
    tpu.vector_store %arg4[%c0_9, %c0_10], %21 {strides = array<i32>} : memref<8x128xf32, #tpu.memory_space<vmem>>, vector<8x128xf32>,
    return
  }
  func.func @transform_0(%arg0: i32) -> (i32, i32) {
    %c0_i32 = arith.constant 0 : i32
    %c0_i32_0 = arith.constant 0 : i32
    return %c0_i32, %arg0 : i32, i32
  }
  func.func @transform_1(%arg0: i32) -> (i32, i32) {
    %c0_i32 = arith.constant 0 : i32
    %c0_i32_0 = arith.constant 0 : i32
    return %c0_i32, %arg0 : i32, i32
  }
  func.func @transform_2(%arg0: i32) -> (i32, i32) {
    %c0_i32 = arith.constant 0 : i32
    %c0_i32_0 = arith.constant 0 : i32
    return %c0_i32, %arg0 : i32, i32
  }
  func.func @transform_3(%arg0: i32) -> (i32, i32) {
    %c0_i32 = arith.constant 0 : i32
    %c0_i32_0 = arith.constant 0 : i32
    return %c0_i32, %arg0 : i32, i32
  }
}

module attributes {stable_mosaic.version = 11 : i64} {
  func.func @_logits_kernel(%arg0: i32, %arg1: memref<8x128xf32, #tpu.memory_space<vmem>>, %arg2: memref<128x128xf32, #tpu.memory_space<vmem>>, %arg3: memref<8x128xf32, #tpu.memory_space<vmem>>) attributes {dimension_semantics = [#tpu.dimension_semantics<parallel>], iteration_bounds = array<i64: 1>, scalar_prefetch = 0 : i64, scratch_operands = 0 : i64, tpu.core_type = #tpu.core_type<tc>, window_params = [{pipeline_mode = #tpu.pipeline_mode<synchronous>, transform_indices = @transform_0, window_bounds = array<i64: 8, 128>}, {transform_indices = @transform_1, window_bounds = array<i64: 128, 128>}, {transform_indices = @transform_2, window_bounds = array<i64: 8, 128>}]} {
    %c0 = arith.constant 0 : index
    %c0_0 = arith.constant 0 : index
    %0 = vector.load %arg1[%c0, %c0_0] : memref<8x128xf32, #tpu.memory_space<vmem>>, vector<8x128xf32>
    %c0_1 = arith.constant 0 : index
    %c0_2 = arith.constant 0 : index
    %1 = vector.load %arg2[%c0_1, %c0_2] : memref<128x128xf32, #tpu.memory_space<vmem>>, vector<128x128xf32>
    %cst = arith.constant dense<0.000000e+00> : vector<8x128xf32>
    %2 = tpu.matmul %0, %1, %cst {dimension_numbers = #tpu.dot_dimension_numbers<[1], [0], [0], [1], [0, 0, 1, 1], [], []>} : vector<8x128xf32>, vector<128x128xf32>, vector<8x128xf32> -> vector<8x128xf32>
    %c0_3 = arith.constant 0 : index
    %c0_4 = arith.constant 0 : index
    %3 = vector.load %arg3[%c0_3, %c0_4] : memref<8x128xf32, #tpu.memory_space<vmem>>, vector<8x128xf32>
    tpu.vector_store %arg3[%c0_3, %c0_4], %2 {strides = array<i32>} : memref<8x128xf32, #tpu.memory_space<vmem>>, vector<8x128xf32>,
    return
  }
  func.func @transform_0(%arg0: i32) -> (i32, i32) {
    %c0_i32 = arith.constant 0 : i32
    %c0_i32_0 = arith.constant 0 : i32
    %c0_i32_1 = arith.constant 0 : i32
    return %c0_i32, %c0_i32_0 : i32, i32
  }
  func.func @transform_1(%arg0: i32) -> (i32, i32) {
    %c0_i32 = arith.constant 0 : i32
    %c0_i32_0 = arith.constant 0 : i32
    return %c0_i32, %arg0 : i32, i32
  }
  func.func @transform_2(%arg0: i32) -> (i32, i32) {
    %c0_i32 = arith.constant 0 : i32
    %c0_i32_0 = arith.constant 0 : i32
    return %c0_i32, %arg0 : i32, i32
  }
}

</mosaic_0001>

<llo_original>
// kernel: bnneck_forward.3
$region0: #{bnneck_forward.3}
  #allocation0 [shape = 'u32[]', space=smem, size = 0x4, offset = 0x4, fixed_abs, tag = 'smem constant byte address 0x4 - core index']
  #allocation1 [shape = 'u32[144,128]{1,0:T(1,128)}', space=vmem, size = 0x12000, scoped, tag = 'internal scratch']
  %s0 = inlined_call_operand.vmem [shape: f32[8,128], index: 0, kind: input, shape index: {}]
  %s1 = inlined_call_operand.hbm [shape: f32[128,128], index: 1, kind: input, shape index: {}]
  %s2 = inlined_call_operand.hbm [shape: f32[8,128], index: 2, kind: output, shape index: {}]
  %s3 = sld [smem:[#allocation0]]
  $region22: #{bnneck_forward.3} parent=0
    _
  %s5 = ssub.s32 1, %s3
  %s6 = scalar_select 0, %s5, %s3
  $region1: #{bnneck_forward.3} parent=0
    #allocation2 [shape = 'u8[65536]{0}', space=vmem, size = 0x10000, scoped, tag = 'input window, operand 1, single buffered']
    #allocation3 [shape = 's32[1]{0}', space=sflag, size = 0x4, scoped, tag = 'scoped memory for bnneck_forward.3']
    #allocation4 [shape = 's32[1]{0}', space=sflag, size = 0x4, scoped, tag = 'scoped memory for bnneck_forward.3']
    #allocation5 [shape = 'u8[4096]{0}', space=vmem, size = 0x1000, scoped, tag = 'output window, operand 0, single buffered']
    %7 = vsyncpa [#allocation3], 0
    %8 = vsyncpa [#allocation4], 0
    // Predicated region
    $region2: #{bnneck_forward.3} parent=1 // pred_check
      _
    $region3: #{bnneck_forward.3} parent=1 // pred_check_branch
      %10 = sbr.rel (0) target = $region5
    $region4: #{bnneck_forward.3} parent=1 // pred_region
      _
    $region5: #{bnneck_forward.3} parent=1 // pred_fallthru
      _
    // Predicated region
    $region6: #{bnneck_forward.3} parent=1 // pred_check
      _
    $region7: #{bnneck_forward.3} parent=1 // pred_check_branch
      %12 = sbr.rel (0) target = $region9
    $region8: #{bnneck_forward.3} parent=1 // pred_region
      %s14 = ssub.s32 2048, 2048
      %15 = vsyncadd [#allocation3], %s14
      %s16 = sshll.u32 [#allocation2], 4
      %s17 = int_to_ptr.vmem [resolvable:$true] %s16
      %22 = dma.hbm_to_vmem [thread:$0]  %s1, 2048, %s17, [#allocation3], 128, 128, 8
    $region9: #{bnneck_forward.3} parent=1 // pred_fallthru
      _
    // Predicated region
    $region10: #{bnneck_forward.3} parent=1 // pred_check
      _
    $region11: #{bnneck_forward.3} parent=1 // pred_check_branch
      %24 = sbr.rel (0) target = $region13
    $region12: #{bnneck_forward.3} parent=1 // pred_region
      %25 = dma.done [#allocation3], 2048
    $region13: #{bnneck_forward.3} parent=1 // pred_fallthru
      _
    %v26 = vld [vmem:[%s0] sm:$0xff]
    %v27 = vld [vmem:[#allocation2] sm:$0xff]
    %v28 = vld [vmem:[#allocation2 + $0x8] sm:$0xff]
    %v29 = vld [vmem:[#allocation2 + $0x10] sm:$0xff]
    %v30 = vld [vmem:[#allocation2 + $0x18] sm:$0xff]
    %v31 = vld [vmem:[#allocation2 + $0x20] sm:$0xff]
    %v32 = vld [vmem:[#allocation2 + $0x28] sm:$0xff]
    %v33 = vld [vmem:[#allocation2 + $0x30] sm:$0xff]
    %v34 = vld [vmem:[#allocation2 + $0x38] sm:$0xff]
    %v35 = vld [vmem:[#allocation2 + $0x40] sm:$0xff]
    %v36 = vld [vmem:[#allocation2 + $0x48] sm:$0xff]
    %v37 = vld [vmem:[#allocation2 + $0x50] sm:$0xff]
    %v38 = vld [vmem:[#allocation2 + $0x58] sm:$0xff]
    %v39 = vld [vmem:[#allocation2 + $0x60] sm:$0xff]
    %v40 = vld [vmem:[#allocation2 + $0x68] sm:$0xff]
    %v41 = vld [vmem:[#allocation2 + $0x70] sm:$0xff]
    %v42 = vld [vmem:[#allocation2 + $0x78] sm:$0xff]
    %43 = vmatprep.subr.mxu0 0.0
    %44 = vmatpush1.msra.mxu0 %v42
    %45 = vmatprep.subr.mxu0 0.0
    %46 = vmatpush1.msra.mxu0 %v41
    %47 = vmatprep.subr.mxu0 0.0
    %48 = vmatpush1.msra.mxu0 %v40
    %49 = vmatprep.subr.mxu0 0.0
    %50 = vmatpush1.msra.mxu0 %v39
    %51 = vmatprep.subr.mxu0 0.0
    %52 = vmatpush1.msra.mxu0 %v38
    %53 = vmatprep.subr.mxu0 0.0
    %54 = vmatpush1.msra.mxu0 %v37
    %55 = vmatprep.subr.mxu0 0.0
    %56 = vmatpush1.msra.mxu0 %v36
    %57 = vmatprep.subr.mxu0 0.0
    %58 = vmatpush1.msra.mxu0 %v35
    %59 = vmatprep.subr.mxu0 0.0
    %60 = vmatpush1.msra.mxu0 %v34
    %61 = vmatprep.subr.mxu0 0.0
    %62 = vmatpush1.msra.mxu0 %v33
    %63 = vmatprep.subr.mxu0 0.0
    %64 = vmatpush1.msra.mxu0 %v32
    %65 = vmatprep.subr.mxu0 0.0
    %66 = vmatpush1.msra.mxu0 %v31
    %67 = vmatprep.subr.mxu0 0.0
    %68 = vmatpush1.msra.mxu0 %v30
    %69 = vmatprep.subr.mxu0 0.0
    %70 = vmatpush1.msra.mxu0 %v29
    %71 = vmatprep.subr.mxu0 0.0
    %72 = vmatpush1.msra.mxu0 %v28
    %73 = vmatprep.subr.mxu0 0.0
    %74 = vmatpush1.msra.mxu0 %v27
    %75 = vmatprep.subr.mxu0 0.0
    %76 = vmatpush2.msra.mxu0 0.0
    %77 = vmatprep.subr.mxu0 0.0
    %78 = vmatpush2.msra.mxu0 0.0
    %79 = vmatprep.subr.mxu0 0.0
    %80 = vmatpush2.msra.mxu0 0.0
    %81 = vmatprep.subr.mxu0 0.0
    %82 = vmatpush2.msra.mxu0 0.0
    %83 = vmatprep.subr.mxu0 0.0
    %84 = vmatpush2.msra.mxu0 0.0
    %85 = vmatprep.subr.mxu0 0.0
    %86 = vmatpush2.msra.mxu0 0.0
    %87 = vmatprep.subr.mxu0 0.0
    %88 = vmatpush2.msra.mxu0 0.0
    %89 = vmatprep.subr.mxu0 0.0
    %90 = vmatpush2.msra.mxu0 0.0
    %91 = vmatprep.subr.mxu0 0.0
    %92 = vmatpush2.msra.mxu0 0.0
    %93 = vmatprep.subr.mxu0 0.0
    %94 = vmatpush2.msra.mxu0 0.0
    %95 = vmatprep.subr.mxu0 0.0
    %96 = vmatpush2.msra.mxu0 0.0
    %97 = vmatprep.subr.mxu0 0.0
    %98 = vmatpush2.msra.mxu0 0.0
    %99 = vmatprep.subr.mxu0 0.0
    %100 = vmatpush2.msra.mxu0 0.0
    %101 = vmatprep.subr.mxu0 0.0
    %102 = vmatpush2.msra.mxu0 0.0
    %103 = vmatprep.subr.mxu0 0.0
    %104 = vmatpush2.msra.mxu0 0.0
    %105 = vmatprep.subr.mxu0 0.0
    %106 = vmatpush2.msra.mxu0 0.0
    %107 = vmatprep.mubr.f32.mxu0 0.0
    %108 = vmatmul.mubr.f32.gmra.mxu0 %v26
    %v109 = vpop.f32.mrf.mxu0
    %v110 = vadd.f32 0.0, %v109
    %v111 = vpop.f32.mrf.mxu0
    %112 = vdwg.mxu0
    %113 = vst [vmem:[#allocation5] sm:$0xff] %v110
    // Predicated region
    $region14: #{bnneck_forward.3} parent=1 // pred_check
      _
    $region15: #{bnneck_forward.3} parent=1 // pred_check_branch
      %115 = sbr.rel (0) target = $region17
    $region16: #{bnneck_forward.3} parent=1 // pred_region
      %s117 = ssub.s32 128, 128
      %118 = vsyncadd [#allocation4], %s117
      %s120 = sshll.u32 [#allocation5], 4
      %s121 = int_to_ptr.vmem [resolvable:$true] %s120
      %123 = dma.vmem_to_hbm [thread:$0]  %s121, 128, %s2, [#allocation4]
    $region17: #{bnneck_forward.3} parent=1 // pred_fallthru
      _
    // Predicated region
    $region18: #{bnneck_forward.3} parent=1 // pred_check
      _
    $region19: #{bnneck_forward.3} parent=1 // pred_check_branch
      %125 = sbr.rel (0) target = $region21
    $region20: #{bnneck_forward.3} parent=1 // pred_region
      %126 = dma.done [#allocation4], 128
    $region21: #{bnneck_forward.3} parent=1 // pred_fallthru
      _
    %127 = vsyncpa [#allocation3], 1
    %128 = vsyncpa [#allocation4], 1

// kernel: bnneck_forward.2
$region0: #{bnneck_forward.2}
  #allocation0 [shape = 'u32[]', space=smem, size = 0x4, offset = 0x4, fixed_abs, tag = 'smem constant byte address 0x4 - core index']
  #allocation1 [shape = 'u32[144,128]{1,0:T(1,128)}', space=vmem, size = 0x12000, scoped, tag = 'internal scratch']
  %s0 = inlined_call_operand.vmem [shape: f32[8,128], index: 0, kind: input, shape index: {}]
  %s1 = inlined_call_operand.vmem [shape: f32[1,128], index: 1, kind: input, shape index: {}]
  %s2 = inlined_call_operand.vmem [shape: f32[1,128], index: 2, kind: input, shape index: {}]
  %s3 = inlined_call_operand.vmem [shape: f32[8,128], index: 3, kind: output, shape index: {}]
  %s4 = sld [smem:[#allocation0]]
  $region22: #{bnneck_forward.2} parent=0
    _
  %s6 = ssub.s32 1, %s4
  %s7 = scalar_select 0, %s6, %s4
  // Predicated region
  $region2: #{bnneck_forward.2} parent=0 // pred_check
    _
  $region3: #{bnneck_forward.2} parent=0 // pred_check_branch
    %9 = sbr.rel (0) target = $region5
  $region4: #{bnneck_forward.2} parent=0 // pred_region
    _
  $region5: #{bnneck_forward.2} parent=0 // pred_fallthru
    _
  // Predicated region
  $region6: #{bnneck_forward.2} parent=0 // pred_check
    _
  $region7: #{bnneck_forward.2} parent=0 // pred_check_branch
    %11 = sbr.rel (0) target = $region9
  $region8: #{bnneck_forward.2} parent=0 // pred_region
    _
  $region9: #{bnneck_forward.2} parent=0 // pred_fallthru
    _
  // Predicated region
  $region10: #{bnneck_forward.2} parent=0 // pred_check
    _
  $region11: #{bnneck_forward.2} parent=0 // pred_check_branch
    %13 = sbr.rel (0) target = $region13
  $region12: #{bnneck_forward.2} parent=0 // pred_region
    _
  $region13: #{bnneck_forward.2} parent=0 // pred_fallthru
    _
  %v14 = vld [vmem:[%s0] sm:$0xff]
  %v15 = vrot.slane %v14, 4
  %v16 = vadd.f32 %v14, %v15
  %v17 = vrot.slane %v16, 2
  %v18 = vadd.f32 %v16, %v17
  %v19 = vrot.slane %v18, 1
  %v20 = vadd.f32 %v18, %v19
  %v21 = vrcp.pop 8.0
  %v22 = vmul.f32 %v20, %v21
  %v23 = vsub.f32 %v14, %v22
  %v24 = vmul.f32 %v23, %v23
  %v25 = vrot.slane %v24, 4
  %v26 = vadd.f32 %v24, %v25
  %v27 = vrot.slane %v26, 2
  %v28 = vadd.f32 %v26, %v27
  %v29 = vrot.slane %v28, 1
  %v30 = vadd.f32 %v28, %v29
  %v31 = vmul.f32 %v30, %v21
  %v32 = vadd.f32 %v31, 1e-05
  %v33 = vrsqrt.pop %v32
  %v34 = vld [vmem:[%s1] sm:$0x1]
  %v35 = vmul.f32 %v33, %v34
  %v36 = vlaneseq
  %v37 = vshrl.u32 %v36, 7
  %v38 = vsub.s32 0, %v37
  %v39 = vrot.slane %v35, %v38
  %v40 = vmul.f32 %v23, %v39
  %v41 = vld [vmem:[%s2] sm:$0x1]
  %v43 = vlaneseq
  %v44 = vshrl.u32 %v43, 7
  %v45 = vsub.s32 0, %v44
  %v46 = vrot.slane %v41, %v45
  %v48 = vadd.f32 %v40, %v46
  %49 = vst [vmem:[%s3] sm:$0xff] %v48
  // Predicated region
  $region14: #{bnneck_forward.2} parent=0 // pred_check
    _
  $region15: #{bnneck_forward.2} parent=0 // pred_check_branch
    %51 = sbr.rel (0) target = $region17
  $region16: #{bnneck_forward.2} parent=0 // pred_region
    _
  $region17: #{bnneck_forward.2} parent=0 // pred_fallthru
    _
  // Predicated region
  $region18: #{bnneck_forward.2} parent=0 // pred_check
    _
  $region19: #{bnneck_forward.2} parent=0 // pred_check_branch
    %53 = sbr.rel (0) target = $region21
  $region20: #{bnneck_forward.2} parent=0 // pred_region
    _
  $region21: #{bnneck_forward.2} parent=0 // pred_fallthru
    _

</llo_original>
